<compile_context>
chip_gen: v5e
topology: v5e:2x2
jax: 0.10.0
libtpu: 0.0.40
codegen_flags: <defaults>
</compile_context>

<pallas_src>
import jax
import jax.numpy as jnp
from jax.experimental import pallas as pl
from jax.experimental.pallas import tpu as pltpu

_HIGHEST = jax.lax.Precision.HIGHEST


# ----------------------------------------------------------------------------
# Fused kernel body.  One grid step == one packed block of SPB samples.
#
#   prm_ref : (1, R, R + 2*Rc + 1)  folded per-block affine map
#             [ A_z | A_cc | A_cu | bias ] (block-diagonal across the SPB
#             samples packed on the sublane axis; c_out/c_skip and the CFG
#             guidance scales are already folded in by the wrapper).
#   z_ref   : (1, R,  HW)  latents,        R  = SPB * C
#   cc_ref  : (1, Rc, HW)  cond   c_concat, Rc = SPB * Cc
#   cu_ref  : (1, Rc, HW)  uncond c_concat
#   o_ref   : (1, R,  HW)  guided output
#
# Everything is (rows-on-sublanes, HW-on-lanes): lane-dense loads/stores, and
# the 1x1 "conv" + CFG combine is R + 2*Rc broadcast-FMAs on the VPU.
# ----------------------------------------------------------------------------
def _cfg_denoiser_kernel(prm_ref, z_ref, cc_ref, cu_ref, o_ref):
    R = z_ref.shape[1]
    Rc = cc_ref.shape[1]
    bias_col = R + 2 * Rc

    prm = prm_ref[0]                   # (R, R + 2*Rc + 1)
    z = z_ref[0]                       # (R,  HW)
    cc = cc_ref[0]                     # (Rc, HW)
    cu = cu_ref[0]                     # (Rc, HW)

    # Start from the folded bias column (broadcasts along lanes), then fully
    # unrolled column-slice broadcast-FMAs: acc[r, :] += prm[r, j] * x[j, :].
    acc = prm[:, bias_col:bias_col + 1] + prm[:, 0:1] * z[0:1, :]
    for j in range(1, R):                                    # static unroll
        acc = acc + prm[:, j:j + 1] * z[j:j + 1, :]
    for j in range(Rc):
        acc = acc + prm[:, R + j:R + j + 1] * cc[j:j + 1, :]
    for j in range(Rc):
        acc = acc + prm[:, R + Rc + j:R + Rc + j + 1] * cu[j:j + 1, :]
    o_ref[0] = acc.astype(o_ref.dtype)


def _block_diag(m, spb):
    """(G*spb, r, c) -> (G, spb*r, spb*c) block-diagonal (one block / sample)."""
    gs, r, c = m.shape
    g = gs // spb
    m = m.reshape(g, spb, r, c)
    eye = jnp.eye(spb, dtype=m.dtype)
    out = jnp.einsum('gprc,pq->gprqc', m, eye)
    return out.reshape(g, spb * r, spb * c)


# ----------------------------------------------------------------------------
# CFGDenoiser.forward: O(B*C) glue in plain JAX, everything heavy in the kernel.
# ----------------------------------------------------------------------------
def cfg_denoiser_forward(z, sigma, cond, uncond, text_cfg_scale,
                         image_cfg_scale, params):
    B, C, H, W = z.shape
    HW = H * W
    cc = cond['c_concat'][0]
    cu = uncond['c_concat'][0]
    Cc = cc.shape[1]

    ts = jnp.float32(text_cfg_scale)
    ims = jnp.float32(image_cfg_scale)

    # ---- tiny O(B*C) per-sample glue (cross-attn pooling, sigma precond) ----
    pooled_c = jnp.mean(cond['c_crossattn'][0], axis=1)              # (B, D)
    pooled_u = jnp.mean(uncond['c_crossattn'][0], axis=1)            # (B, D)
    ctx_c = jnp.einsum('bd,dc->bc', pooled_c, params['w_ctx'],
                       precision=_HIGHEST)                           # (B, C)
    ctx_u = jnp.einsum('bd,dc->bc', pooled_u, params['w_ctx'],
                       precision=_HIGHEST)                           # (B, C)
    b1 = params['b1'].reshape(1, C).astype(jnp.float32)

    c_out = 1.0 / (sigma ** 2 + 1.0)                                 # (B,)
    c_skip = sigma / (sigma ** 2 + 1.0)                              # (B,)

    # ---- exact CFG fold (valid because the synthetic inner model is linear):
    #   out = c_out*( Wz z + (0.5+is) Wc cc + (0.5-is) Wc cu
    #                 + b1 + (0.5+ts) ctx_c + (0.5-ts) ctx_u ) + c_skip*z
    wz = params['w1'][:C].astype(jnp.float32)                        # (C,  C)
    wc = params['w1'][C:].astype(jnp.float32)                        # (Cc, C)
    eye_c = jnp.eye(C, dtype=jnp.float32)
    a_z = (c_out[:, None, None] * wz.T[None]
           + c_skip[:, None, None] * eye_c[None])                    # (B, C, C)
    a_cc = (c_out * (0.5 + ims))[:, None, None] * wc.T[None]         # (B, C, Cc)
    a_cu = (c_out * (0.5 - ims))[:, None, None] * wc.T[None]         # (B, C, Cc)
    bias = c_out[:, None] * (b1 + (0.5 + ts) * ctx_c
                             + (0.5 - ts) * ctx_u)                   # (B, C)

    # ---- pack SPB samples per block so f32 tiles use all 8 sublanes ----
    spb = max(1, 8 // C) if C <= 8 else 1
    bp = -(-B // spb) * spb                    # B padded up to a multiple of SPB
    pad = bp - B

    z_l = z.reshape(B, C, HW)                  # NCHW -> (B, C, HW): pure reshape
    cc_l = cc.reshape(B, Cc, HW)
    cu_l = cu.reshape(B, Cc, HW)
    if pad:
        pad3 = ((0, pad), (0, 0), (0, 0))
        z_l, cc_l, cu_l = (jnp.pad(a, pad3) for a in (z_l, cc_l, cu_l))
        a_z, a_cc, a_cu = (jnp.pad(a, pad3) for a in (a_z, a_cc, a_cu))
        bias = jnp.pad(bias, ((0, pad), (0, 0)))

    g = bp // spb
    r = spb * C
    rc = spb * Cc
    z_p = z_l.reshape(g, r, HW)
    cc_p = cc_l.reshape(g, rc, HW)
    cu_p = cu_l.reshape(g, rc, HW)

    # One tiny per-block parameter panel: [ A_z | A_cc | A_cu | bias ].
    prm = jnp.concatenate([_block_diag(a_z, spb),          # (g, r, r)
                           _block_diag(a_cc, spb),         # (g, r, rc)
                           _block_diag(a_cu, spb),         # (g, r, rc)
                           bias.reshape(g, r, 1)], axis=-1).astype(jnp.float32)
    p_cols = r + 2 * rc + 1

    # TODO(synk): for very large latents (HW >~ 64K) also tile the HW axis so
    # double-buffered blocks stay comfortably inside v7x's 64 MiB VMEM.
    out = pl.pallas_call(
        _cfg_denoiser_kernel,
        out_shape=jax.ShapeDtypeStruct((g, r, HW), jnp.float32),
        grid=(g,),
        in_specs=[
            pl.BlockSpec((1, r, p_cols), lambda i: (i, 0, 0)),   # folded params
            pl.BlockSpec((1, r, HW), lambda i: (i, 0, 0)),       # z
            pl.BlockSpec((1, rc, HW), lambda i: (i, 0, 0)),      # cond c_concat
            pl.BlockSpec((1, rc, HW), lambda i: (i, 0, 0)),      # uncond c_concat
        ],
        out_specs=pl.BlockSpec((1, r, HW), lambda i: (i, 0, 0)),
        compiler_params=pltpu.CompilerParams(
            # TODO(synk): on v7x with larger batches switch this axis to
            # pltpu.CORE_PARALLEL (or pl.core_map) so both TensorCores get work.
            dimension_semantics=("parallel",),
            vmem_limit_bytes=32 * 1024 * 1024),
    )(prm, z_p, cc_p, cu_p)

    return out.reshape(bp, C, HW)[:B].reshape(B, C, H, W)


# ----------------------------------------------------------------------------
# Pure-JAX reference: mirrors the PyTorch module flow (3x repeat, chunk(3),
# guidance combine) with the same synthetic inner model.
# ----------------------------------------------------------------------------
def cfg_denoiser_reference(z, sigma, cond, uncond, text_cfg_scale,
                           image_cfg_scale, params):
    B, C, H, W = z.shape
    cfg_z = jnp.concatenate([z, z, z], axis=0)
    cfg_sigma = jnp.concatenate([sigma, sigma, sigma], axis=0)
    cross = jnp.concatenate([cond['c_crossattn'][0], uncond['c_crossattn'][0],
                             cond['c_crossattn'][0]], axis=0)
    concat_img = jnp.concatenate([cond['c_concat'][0], cond['c_concat'][0],
                                  uncond['c_concat'][0]], axis=0)

    xcat = jnp.concatenate([cfg_z, concat_img], axis=1)            # (3B, C+Cc, H, W)
    h = jnp.einsum('bihw,ic->bchw', xcat, params['w1'], precision=_HIGHEST)
    h = h + params['b1'].reshape(1, C, 1, 1)
    ctx = jnp.einsum('bd,dc->bc', jnp.mean(cross, axis=1), params['w_ctx'],
                     precision=_HIGHEST).reshape(3 * B, C, 1, 1)
    h = h + ctx
    c_out = (1.0 / (cfg_sigma ** 2 + 1.0)).reshape(3 * B, 1, 1, 1)
    c_skip = (cfg_sigma / (cfg_sigma ** 2 + 1.0)).reshape(3 * B, 1, 1, 1)
    out = c_out * h + c_skip * cfg_z
    out_cond, out_img_cond, out_txt_cond = jnp.split(out, 3, axis=0)
    return (0.5 * (out_img_cond + out_txt_cond)
            + text_cfg_scale * (out_cond - out_img_cond)
            + image_cfg_scale * (out_cond - out_txt_cond))


if __name__ == "__main__":
    key = jax.random.PRNGKey(0)
    B, C, H, W = 2, 4, 16, 16        # latent batch / channels / spatial
    Cc, T, D = 4, 8, 32              # c_concat channels, text seq, text hidden
    ks = jax.random.split(key, 9)

    z = jax.random.normal(ks[0], (B, C, H, W), jnp.float32)
    sigma = jax.random.uniform(ks[1], (B,), jnp.float32, minval=0.1, maxval=2.0)
    cond = {
        'c_crossattn': [jax.random.normal(ks[2], (B, T, D), jnp.float32)],
        'c_concat': [jax.random.normal(ks[3], (B, Cc, H, W), jnp.float32)],
    }
    uncond = {
        'c_crossattn': [jnp.zeros((B, T, D), jnp.float32)],
        'c_concat': [jnp.zeros((B, Cc, H, W), jnp.float32)],
    }

    # Deterministic synthetic inner-model parameters (no checkpoint load).
    params = {
        'w1': 0.1 * jax.random.normal(ks[4], (C + Cc, C), jnp.float32),
        'b1': 0.01 * jax.random.normal(ks[5], (1, C), jnp.float32),
        'w_ctx': 0.1 * jax.random.normal(ks[6], (D, C), jnp.float32),
    }
    text_cfg_scale, image_cfg_scale = 7.5, 1.5

    out = cfg_denoiser_forward(z, sigma, cond, uncond,
                               text_cfg_scale, image_cfg_scale, params)
    out = jax.block_until_ready(out)

    ref = cfg_denoiser_reference(z, sigma, cond, uncond,
                                 text_cfg_scale, image_cfg_scale, params)
    assert out.shape == (B, C, H, W)
    assert jnp.allclose(out, ref, atol=1e-4, rtol=1e-4), "mismatch vs reference"
    print("KERNEL_OK")
</pallas_src>

<mosaic_0001>
module attributes {stable_mosaic.version = 11 : i64} {
  func.func @_cfg_denoiser_kernel(%arg0: i32, %arg1: memref<1x8x25xf32, #tpu.memory_space<vmem>>, %arg2: memref<1x8x256xf32, #tpu.memory_space<vmem>>, %arg3: memref<1x8x256xf32, #tpu.memory_space<vmem>>, %arg4: memref<1x8x256xf32, #tpu.memory_space<vmem>>, %arg5: memref<1x8x256xf32, #tpu.memory_space<vmem>>) attributes {dimension_semantics = [#tpu.dimension_semantics<parallel>], iteration_bounds = array<i64: 1>, scalar_prefetch = 0 : i64, scratch_operands = 0 : i64, tpu.core_type = #tpu.core_type<tc>, window_params = [{transform_indices = @transform_0, window_bounds = array<i64: 1, 8, 25>}, {transform_indices = @transform_1, window_bounds = array<i64: 1, 8, 256>}, {transform_indices = @transform_2, window_bounds = array<i64: 1, 8, 256>}, {transform_indices = @transform_3, window_bounds = array<i64: 1, 8, 256>}, {transform_indices = @transform_4, window_bounds = array<i64: 1, 8, 256>}]} {
    %c0 = arith.constant 0 : index
    %c0_0 = arith.constant 0 : index
    %c0_1 = arith.constant 0 : index
    %0 = vector.load %arg1[%c0, %c0_0, %c0_1] : memref<1x8x25xf32, #tpu.memory_space<vmem>>, vector<1x8x25xf32>
    %1 = vector.shape_cast %0 : vector<1x8x25xf32> to vector<8x25xf32>
    %c0_2 = arith.constant 0 : index
    %c0_3 = arith.constant 0 : index
    %c0_4 = arith.constant 0 : index
    %2 = vector.load %arg2[%c0_2, %c0_3, %c0_4] : memref<1x8x256xf32, #tpu.memory_space<vmem>>, vector<1x8x256xf32>
    %3 = vector.shape_cast %2 : vector<1x8x256xf32> to vector<8x256xf32>
    %c0_5 = arith.constant 0 : index
    %c0_6 = arith.constant 0 : index
    %c0_7 = arith.constant 0 : index
    %4 = vector.load %arg3[%c0_5, %c0_6, %c0_7] : memref<1x8x256xf32, #tpu.memory_space<vmem>>, vector<1x8x256xf32>
    %5 = vector.shape_cast %4 : vector<1x8x256xf32> to vector<8x256xf32>
    %c0_8 = arith.constant 0 : index
    %c0_9 = arith.constant 0 : index
    %c0_10 = arith.constant 0 : index
    %6 = vector.load %arg4[%c0_8, %c0_9, %c0_10] : memref<1x8x256xf32, #tpu.memory_space<vmem>>, vector<1x8x256xf32>
    %7 = vector.shape_cast %6 : vector<1x8x256xf32> to vector<8x256xf32>
    %8 = vector.extract_strided_slice %1 {offsets = [0, 24], sizes = [8, 1], strides = [1, 1]} : vector<8x25xf32> to vector<8x1xf32>
    %9 = vector.extract_strided_slice %1 {offsets = [0, 0], sizes = [8, 1], strides = [1, 1]} : vector<8x25xf32> to vector<8x1xf32>
    %10 = vector.extract_strided_slice %3 {offsets = [0, 0], sizes = [1, 256], strides = [1, 1]} : vector<8x256xf32> to vector<1x256xf32>
    %11 = vector.broadcast %9 : vector<8x1xf32> to vector<8x256xf32>
    %12 = vector.broadcast %10 : vector<1x256xf32> to vector<8x256xf32>
    %13 = arith.mulf %11, %12 : vector<8x256xf32>
    %14 = vector.broadcast %8 : vector<8x1xf32> to vector<8x256xf32>
    %15 = arith.addf %14, %13 : vector<8x256xf32>
    %16 = vector.extract_strided_slice %1 {offsets = [0, 1], sizes = [8, 1], strides = [1, 1]} : vector<8x25xf32> to vector<8x1xf32>
    %17 = vector.extract_strided_slice %3 {offsets = [1, 0], sizes = [1, 256], strides = [1, 1]} : vector<8x256xf32> to vector<1x256xf32>
    %18 = vector.broadcast %16 : vector<8x1xf32> to vector<8x256xf32>
    %19 = vector.broadcast %17 : vector<1x256xf32> to vector<8x256xf32>
    %20 = arith.mulf %18, %19 : vector<8x256xf32>
    %21 = arith.addf %15, %20 : vector<8x256xf32>
    %22 = vector.extract_strided_slice %1 {offsets = [0, 2], sizes = [8, 1], strides = [1, 1]} : vector<8x25xf32> to vector<8x1xf32>
    %23 = vector.extract_strided_slice %3 {offsets = [2, 0], sizes = [1, 256], strides = [1, 1]} : vector<8x256xf32> to vector<1x256xf32>
    %24 = vector.broadcast %22 : vector<8x1xf32> to vector<8x256xf32>
    %25 = vector.broadcast %23 : vector<1x256xf32> to vector<8x256xf32>
    %26 = arith.mulf %24, %25 : vector<8x256xf32>
    %27 = arith.addf %21, %26 : vector<8x256xf32>
    %28 = vector.extract_strided_slice %1 {offsets = [0, 3], sizes = [8, 1], strides = [1, 1]} : vector<8x25xf32> to vector<8x1xf32>
    %29 = vector.extract_strided_slice %3 {offsets = [3, 0], sizes = [1, 256], strides = [1, 1]} : vector<8x256xf32> to vector<1x256xf32>
    %30 = vector.broadcast %28 : vector<8x1xf32> to vector<8x256xf32>
    %31 = vector.broadcast %29 : vector<1x256xf32> to vector<8x256xf32>
    %32 = arith.mulf %30, %31 : vector<8x256xf32>
    %33 = arith.addf %27, %32 : vector<8x256xf32>
    %34 = vector.extract_strided_slice %1 {offsets = [0, 4], sizes = [8, 1], strides = [1, 1]} : vector<8x25xf32> to vector<8x1xf32>
    %35 = vector.extract_strided_slice %3 {offsets = [4, 0], sizes = [1, 256], strides = [1, 1]} : vector<8x256xf32> to vector<1x256xf32>
    %36 = vector.broadcast %34 : vector<8x1xf32> to vector<8x256xf32>
    %37 = vector.broadcast %35 : vector<1x256xf32> to vector<8x256xf32>
    %38 = arith.mulf %36, %37 : vector<8x256xf32>
    %39 = arith.addf %33, %38 : vector<8x256xf32>
    %40 = vector.extract_strided_slice %1 {offsets = [0, 5], sizes = [8, 1], strides = [1, 1]} : vector<8x25xf32> to vector<8x1xf32>
    %41 = vector.extract_strided_slice %3 {offsets = [5, 0], sizes = [1, 256], strides = [1, 1]} : vector<8x256xf32> to vector<1x256xf32>
    %42 = vector.broadcast %40 : vector<8x1xf32> to vector<8x256xf32>
    %43 = vector.broadcast %41 : vector<1x256xf32> to vector<8x256xf32>
    %44 = arith.mulf %42, %43 : vector<8x256xf32>
    %45 = arith.addf %39, %44 : vector<8x256xf32>
    %46 = vector.extract_strided_slice %1 {offsets = [0, 6], sizes = [8, 1], strides = [1, 1]} : vector<8x25xf32> to vector<8x1xf32>
    %47 = vector.extract_strided_slice %3 {offsets = [6, 0], sizes = [1, 256], strides = [1, 1]} : vector<8x256xf32> to vector<1x256xf32>
    %48 = vector.broadcast %46 : vector<8x1xf32> to vector<8x256xf32>
    %49 = vector.broadcast %47 : vector<1x256xf32> to vector<8x256xf32>
    %50 = arith.mulf %48, %49 : vector<8x256xf32>
    %51 = arith.addf %45, %50 : vector<8x256xf32>
    %52 = vector.extract_strided_slice %1 {offsets = [0, 7], sizes = [8, 1], strides = [1, 1]} : vector<8x25xf32> to vector<8x1xf32>
    %53 = vector.extract_strided_slice %3 {offsets = [7, 0], sizes = [1, 256], strides = [1, 1]} : vector<8x256xf32> to vector<1x256xf32>
    %54 = vector.broadcast %52 : vector<8x1xf32> to vector<8x256xf32>
    %55 = vector.broadcast %53 : vector<1x256xf32> to vector<8x256xf32>
    %56 = arith.mulf %54, %55 : vector<8x256xf32>
    %57 = arith.addf %51, %56 : vector<8x256xf32>
    %58 = vector.extract_strided_slice %1 {offsets = [0, 8], sizes = [8, 1], strides = [1, 1]} : vector<8x25xf32> to vector<8x1xf32>
    %59 = vector.extract_strided_slice %5 {offsets = [0, 0], sizes = [1, 256], strides = [1, 1]} : vector<8x256xf32> to vector<1x256xf32>
    %60 = vector.broadcast %58 : vector<8x1xf32> to vector<8x256xf32>
    %61 = vector.broadcast %59 : vector<1x256xf32> to vector<8x256xf32>
    %62 = arith.mulf %60, %61 : vector<8x256xf32>
    %63 = arith.addf %57, %62 : vector<8x256xf32>
    %64 = vector.extract_strided_slice %1 {offsets = [0, 9], sizes = [8, 1], strides = [1, 1]} : vector<8x25xf32> to vector<8x1xf32>
    %65 = vector.extract_strided_slice %5 {offsets = [1, 0], sizes = [1, 256], strides = [1, 1]} : vector<8x256xf32> to vector<1x256xf32>
    %66 = vector.broadcast %64 : vector<8x1xf32> to vector<8x256xf32>
    %67 = vector.broadcast %65 : vector<1x256xf32> to vector<8x256xf32>
    %68 = arith.mulf %66, %67 : vector<8x256xf32>
    %69 = arith.addf %63, %68 : vector<8x256xf32>
    %70 = vector.extract_strided_slice %1 {offsets = [0, 10], sizes = [8, 1], strides = [1, 1]} : vector<8x25xf32> to vector<8x1xf32>
    %71 = vector.extract_strided_slice %5 {offsets = [2, 0], sizes = [1, 256], strides = [1, 1]} : vector<8x256xf32> to vector<1x256xf32>
    %72 = vector.broadcast %70 : vector<8x1xf32> to vector<8x256xf32>
    %73 = vector.broadcast %71 : vector<1x256xf32> to vector<8x256xf32>
    %74 = arith.mulf %72, %73 : vector<8x256xf32>
    %75 = arith.addf %69, %74 : vector<8x256xf32>
    %76 = vector.extract_strided_slice %1 {offsets = [0, 11], sizes = [8, 1], strides = [1, 1]} : vector<8x25xf32> to vector<8x1xf32>
    %77 = vector.extract_strided_slice %5 {offsets = [3, 0], sizes = [1, 256], strides = [1, 1]} : vector<8x256xf32> to vector<1x256xf32>
    %78 = vector.broadcast %76 : vector<8x1xf32> to vector<8x256xf32>
    %79 = vector.broadcast %77 : vector<1x256xf32> to vector<8x256xf32>
    %80 = arith.mulf %78, %79 : vector<8x256xf32>
    %81 = arith.addf %75, %80 : vector<8x256xf32>
    %82 = vector.extract_strided_slice %1 {offsets = [0, 12], sizes = [8, 1], strides = [1, 1]} : vector<8x25xf32> to vector<8x1xf32>
    %83 = vector.extract_strided_slice %5 {offsets = [4, 0], sizes = [1, 256], strides = [1, 1]} : vector<8x256xf32> to vector<1x256xf32>
    %84 = vector.broadcast %82 : vector<8x1xf32> to vector<8x256xf32>
    %85 = vector.broadcast %83 : vector<1x256xf32> to vector<8x256xf32>
    %86 = arith.mulf %84, %85 : vector<8x256xf32>
    %87 = arith.addf %81, %86 : vector<8x256xf32>
    %88 = vector.extract_strided_slice %1 {offsets = [0, 13], sizes = [8, 1], strides = [1, 1]} : vector<8x25xf32> to vector<8x1xf32>
    %89 = vector.extract_strided_slice %5 {offsets = [5, 0], sizes = [1, 256], strides = [1, 1]} : vector<8x256xf32> to vector<1x256xf32>
    %90 = vector.broadcast %88 : vector<8x1xf32> to vector<8x256xf32>
    %91 = vector.broadcast %89 : vector<1x256xf32> to vector<8x256xf32>
    %92 = arith.mulf %90, %91 : vector<8x256xf32>
    %93 = arith.addf %87, %92 : vector<8x256xf32>
    %94 = vector.extract_strided_slice %1 {offsets = [0, 14], sizes = [8, 1], strides = [1, 1]} : vector<8x25xf32> to vector<8x1xf32>
    %95 = vector.extract_strided_slice %5 {offsets = [6, 0], sizes = [1, 256], strides = [1, 1]} : vector<8x256xf32> to vector<1x256xf32>
    %96 = vector.broadcast %94 : vector<8x1xf32> to vector<8x256xf32>
    %97 = vector.broadcast %95 : vector<1x256xf32> to vector<8x256xf32>
    %98 = arith.mulf %96, %97 : vector<8x256xf32>
    %99 = arith.addf %93, %98 : vector<8x256xf32>
    %100 = vector.extract_strided_slice %1 {offsets = [0, 15], sizes = [8, 1], strides = [1, 1]} : vector<8x25xf32> to vector<8x1xf32>
    %101 = vector.extract_strided_slice %5 {offsets = [7, 0], sizes = [1, 256], strides = [1, 1]} : vector<8x256xf32> to vector<1x256xf32>
    %102 = vector.broadcast %100 : vector<8x1xf32> to vector<8x256xf32>
    %103 = vector.broadcast %101 : vector<1x256xf32> to vector<8x256xf32>
    %104 = arith.mulf %102, %103 : vector<8x256xf32>
    %105 = arith.addf %99, %104 : vector<8x256xf32>
    %106 = vector.extract_strided_slice %1 {offsets = [0, 16], sizes = [8, 1], strides = [1, 1]} : vector<8x25xf32> to vector<8x1xf32>
    %107 = vector.extract_strided_slice %7 {offsets = [0, 0], sizes = [1, 256], strides = [1, 1]} : vector<8x256xf32> to vector<1x256xf32>
    %108 = vector.broadcast %106 : vector<8x1xf32> to vector<8x256xf32>
    %109 = vector.broadcast %107 : vector<1x256xf32> to vector<8x256xf32>
    %110 = arith.mulf %108, %109 : vector<8x256xf32>
    %111 = arith.addf %105, %110 : vector<8x256xf32>
    %112 = vector.extract_strided_slice %1 {offsets = [0, 17], sizes = [8, 1], strides = [1, 1]} : vector<8x25xf32> to vector<8x1xf32>
    %113 = vector.extract_strided_slice %7 {offsets = [1, 0], sizes = [1, 256], strides = [1, 1]} : vector<8x256xf32> to vector<1x256xf32>
    %114 = vector.broadcast %112 : vector<8x1xf32> to vector<8x256xf32>
    %115 = vector.broadcast %113 : vector<1x256xf32> to vector<8x256xf32>
    %116 = arith.mulf %114, %115 : vector<8x256xf32>
    %117 = arith.addf %111, %116 : vector<8x256xf32>
    %118 = vector.extract_strided_slice %1 {offsets = [0, 18], sizes = [8, 1], strides = [1, 1]} : vector<8x25xf32> to vector<8x1xf32>
    %119 = vector.extract_strided_slice %7 {offsets = [2, 0], sizes = [1, 256], strides = [1, 1]} : vector<8x256xf32> to vector<1x256xf32>
    %120 = vector.broadcast %118 : vector<8x1xf32> to vector<8x256xf32>
    %121 = vector.broadcast %119 : vector<1x256xf32> to vector<8x256xf32>
    %122 = arith.mulf %120, %121 : vector<8x256xf32>
    %123 = arith.addf %117, %122 : vector<8x256xf32>
    %124 = vector.extract_strided_slice %1 {offsets = [0, 19], sizes = [8, 1], strides = [1, 1]} : vector<8x25xf32> to vector<8x1xf32>
    %125 = vector.extract_strided_slice %7 {offsets = [3, 0], sizes = [1, 256], strides = [1, 1]} : vector<8x256xf32> to vector<1x256xf32>
    %126 = vector.broadcast %124 : vector<8x1xf32> to vector<8x256xf32>
    %127 = vector.broadcast %125 : vector<1x256xf32> to vector<8x256xf32>
    %128 = arith.mulf %126, %127 : vector<8x256xf32>
    %129 = arith.addf %123, %128 : vector<8x256xf32>
    %130 = vector.extract_strided_slice %1 {offsets = [0, 20], sizes = [8, 1], strides = [1, 1]} : vector<8x25xf32> to vector<8x1xf32>
    %131 = vector.extract_strided_slice %7 {offsets = [4, 0], sizes = [1, 256], strides = [1, 1]} : vector<8x256xf32> to vector<1x256xf32>
    %132 = vector.broadcast %130 : vector<8x1xf32> to vector<8x256xf32>
    %133 = vector.broadcast %131 : vector<1x256xf32> to vector<8x256xf32>
    %134 = arith.mulf %132, %133 : vector<8x256xf32>
    %135 = arith.addf %129, %134 : vector<8x256xf32>
    %136 = vector.extract_strided_slice %1 {offsets = [0, 21], sizes = [8, 1], strides = [1, 1]} : vector<8x25xf32> to vector<8x1xf32>
    %137 = vector.extract_strided_slice %7 {offsets = [5, 0], sizes = [1, 256], strides = [1, 1]} : vector<8x256xf32> to vector<1x256xf32>
    %138 = vector.broadcast %136 : vector<8x1xf32> to vector<8x256xf32>
    %139 = vector.broadcast %137 : vector<1x256xf32> to vector<8x256xf32>
    %140 = arith.mulf %138, %139 : vector<8x256xf32>
    %141 = arith.addf %135, %140 : vector<8x256xf32>
    %142 = vector.extract_strided_slice %1 {offsets = [0, 22], sizes = [8, 1], strides = [1, 1]} : vector<8x25xf32> to vector<8x1xf32>
    %143 = vector.extract_strided_slice %7 {offsets = [6, 0], sizes = [1, 256], strides = [1, 1]} : vector<8x256xf32> to vector<1x256xf32>
    %144 = vector.broadcast %142 : vector<8x1xf32> to vector<8x256xf32>
    %145 = vector.broadcast %143 : vector<1x256xf32> to vector<8x256xf32>
    %146 = arith.mulf %144, %145 : vector<8x256xf32>
    %147 = arith.addf %141, %146 : vector<8x256xf32>
    %148 = vector.extract_strided_slice %1 {offsets = [0, 23], sizes = [8, 1], strides = [1, 1]} : vector<8x25xf32> to vector<8x1xf32>
    %149 = vector.extract_strided_slice %7 {offsets = [7, 0], sizes = [1, 256], strides = [1, 1]} : vector<8x256xf32> to vector<1x256xf32>
    %150 = vector.broadcast %148 : vector<8x1xf32> to vector<8x256xf32>
    %151 = vector.broadcast %149 : vector<1x256xf32> to vector<8x256xf32>
    %152 = arith.mulf %150, %151 : vector<8x256xf32>
    %153 = arith.addf %147, %152 : vector<8x256xf32>
    %c0_11 = arith.constant 0 : index
    %c0_12 = arith.constant 0 : index
    %c0_13 = arith.constant 0 : index
    %154 = vector.load %arg5[%c0_11, %c0_12, %c0_13] : memref<1x8x256xf32, #tpu.memory_space<vmem>>, vector<1x8x256xf32>
    %155 = vector.shape_cast %154 : vector<1x8x256xf32> to vector<8x256xf32>
    %156 = vector.shape_cast %153 : vector<8x256xf32> to vector<1x8x256xf32>
    tpu.vector_store %arg5[%c0_11, %c0_12, %c0_13], %156 {strides = array<i32>} : memref<1x8x256xf32, #tpu.memory_space<vmem>>, vector<1x8x256xf32>,
    return
  }
  func.func @transform_0(%arg0: i32) -> (i32, i32, i32) {
    %c0_i32 = arith.constant 0 : i32
    %c0_i32_0 = arith.constant 0 : i32
    %c0_i32_1 = arith.constant 0 : i32
    return %arg0, %c0_i32, %c0_i32_0 : i32, i32, i32
  }
  func.func @transform_1(%arg0: i32) -> (i32, i32, i32) {
    %c0_i32 = arith.constant 0 : i32
    %c0_i32_0 = arith.constant 0 : i32
    %c0_i32_1 = arith.constant 0 : i32
    return %arg0, %c0_i32, %c0_i32_0 : i32, i32, i32
  }
  func.func @transform_2(%arg0: i32) -> (i32, i32, i32) {
    %c0_i32 = arith.constant 0 : i32
    %c0_i32_0 = arith.constant 0 : i32
    %c0_i32_1 = arith.constant 0 : i32
    return %arg0, %c0_i32, %c0_i32_0 : i32, i32, i32
  }
  func.func @transform_3(%arg0: i32) -> (i32, i32, i32) {
    %c0_i32 = arith.constant 0 : i32
    %c0_i32_0 = arith.constant 0 : i32
    %c0_i32_1 = arith.constant 0 : i32
    return %arg0, %c0_i32, %c0_i32_0 : i32, i32, i32
  }
  func.func @transform_4(%arg0: i32) -> (i32, i32, i32) {
    %c0_i32 = arith.constant 0 : i32
    %c0_i32_0 = arith.constant 0 : i32
    %c0_i32_1 = arith.constant 0 : i32
    return %arg0, %c0_i32, %c0_i32_0 : i32, i32, i32
  }
}

</mosaic_0001>

<llo_original>
// kernel: tpu_custom_call.1
$region0: #{tpu_custom_call.1}
  #allocation0 [shape = 'u32[]', space=smem, size = 0x4, offset = 0x4, fixed_abs, tag = 'smem constant byte address 0x4 - core index']
  #allocation1 [shape = 'u32[72,128]{1,0:T(1,128)}', space=vmem, size = 0x9000, scoped, tag = 'internal scratch']
  %s0 = inlined_call_operand.hbm [shape: f32[1,8,25], index: 0, kind: input, shape index: {}]
  %s1 = inlined_call_operand.hbm [shape: f32[1,8,256], index: 1, kind: input, shape index: {}]
  %s2 = inlined_call_operand.hbm [shape: f32[1,8,256], index: 2, kind: input, shape index: {}]
  %s3 = inlined_call_operand.hbm [shape: f32[1,8,256], index: 3, kind: input, shape index: {}]
  %s4 = inlined_call_operand.hbm [shape: f32[1,8,256], index: 4, kind: output, shape index: {}]
  %s5 = sld [smem:[#allocation0]]
  $region42: #{tpu_custom_call.1} parent=0
    _
  %s7 = ssub.s32 1, %s5
  %s8 = scalar_select 0, %s7, %s5
  $region1: #{tpu_custom_call.1} parent=0
    #allocation2 [shape = 'u8[4096]{0}', space=vmem, size = 0x1000, scoped, tag = 'input window, operand 0, single buffered']
    #allocation3 [shape = 's32[1]{0}', space=sflag, size = 0x4, scoped, tag = 'scoped memory for tpu_custom_call.1']
    #allocation4 [shape = 's32[1]{0}', space=sflag, size = 0x4, scoped, tag = 'scoped memory for tpu_custom_call.1']
    #allocation5 [shape = 'u8[8192]{0}', space=vmem, size = 0x2000, scoped, tag = 'input window, operand 1, single buffered']
    #allocation6 [shape = 's32[1]{0}', space=sflag, size = 0x4, scoped, tag = 'scoped memory for tpu_custom_call.1']
    #allocation7 [shape = 'u8[8192]{0}', space=vmem, size = 0x2000, scoped, tag = 'input window, operand 2, single buffered']
    #allocation8 [shape = 'u8[8192]{0}', space=vmem, size = 0x2000, scoped, tag = 'input window, operand 3, single buffered']
    #allocation9 [shape = 's32[1]{0}', space=sflag, size = 0x4, scoped, tag = 'scoped memory for tpu_custom_call.1']
    #allocation10 [shape = 'u8[8192]{0}', space=vmem, size = 0x2000, scoped, tag = 'output window, operand 0, single buffered']
    %9 = vsyncpa [#allocation3], 0
    %10 = vsyncpa [#allocation6], 0
    %11 = vsyncpa [#allocation9], 0
    %12 = vsyncpa [#allocation4], 0
    // Predicated region
    $region2: #{tpu_custom_call.1} parent=1 // pred_check
      _
    $region3: #{tpu_custom_call.1} parent=1 // pred_check_branch
      %14 = sbr.rel (0) target = $region5
    $region4: #{tpu_custom_call.1} parent=1 // pred_region
      %16 = vsyncadd [#allocation3], 0
      %s18 = sshll.u32 %s0, 4
      %s19 = int_to_ptr.hbm [resolvable:$true] %s18
      %s20 = sshll.u32 [#allocation2], 4
      %s21 = int_to_ptr.vmem [resolvable:$true] %s20
      %23 = dma.hbm_to_vmem [thread:$0]  %s19, 128, %s21, [#allocation3]
    $region5: #{tpu_custom_call.1} parent=1 // pred_fallthru
      _
    // Predicated region
    $region6: #{tpu_custom_call.1} parent=1 // pred_check
      _
    $region7: #{tpu_custom_call.1} parent=1 // pred_check_branch
      %25 = sbr.rel (0) target = $region9
    $region8: #{tpu_custom_call.1} parent=1 // pred_region
      %27 = vsyncadd [#allocation6], 0
      %s29 = sshll.u32 %s1, 4
      %s30 = int_to_ptr.hbm [resolvable:$true] %s29
      %s31 = sshll.u32 [#allocation5], 4
      %s32 = int_to_ptr.vmem [resolvable:$true] %s31
      %34 = dma.hbm_to_vmem [thread:$0]  %s30, 256, %s32, [#allocation6]
    $region9: #{tpu_custom_call.1} parent=1 // pred_fallthru
      _
    // Predicated region
    $region10: #{tpu_custom_call.1} parent=1 // pred_check
      _
    $region11: #{tpu_custom_call.1} parent=1 // pred_check_branch
      %36 = sbr.rel (0) target = $region13
    $region12: #{tpu_custom_call.1} parent=1 // pred_region
      %38 = vsyncadd [#allocation6], 0
      %s40 = sshll.u32 %s2, 4
      %s41 = int_to_ptr.hbm [resolvable:$true] %s40
      %s42 = sshll.u32 [#allocation7], 4
      %s43 = int_to_ptr.vmem [resolvable:$true] %s42
      %45 = dma.hbm_to_vmem [thread:$0]  %s41, 256, %s43, [#allocation6]
    $region13: #{tpu_custom_call.1} parent=1 // pred_fallthru
      _
    // Predicated region
    $region14: #{tpu_custom_call.1} parent=1 // pred_check
      _
    $region15: #{tpu_custom_call.1} parent=1 // pred_check_branch
      %47 = sbr.rel (0) target = $region17
    $region16: #{tpu_custom_call.1} parent=1 // pred_region
      %49 = vsyncadd [#allocation9], 0
      %s51 = sshll.u32 %s3, 4
      %s52 = int_to_ptr.hbm [resolvable:$true] %s51
      %s53 = sshll.u32 [#allocation8], 4
      %s54 = int_to_ptr.vmem [resolvable:$true] %s53
      %56 = dma.hbm_to_vmem [thread:$0]  %s52, 256, %s54, [#allocation9]
    $region17: #{tpu_custom_call.1} parent=1 // pred_fallthru
      _
    // Predicated region
    $region18: #{tpu_custom_call.1} parent=1 // pred_check
      _
    $region19: #{tpu_custom_call.1} parent=1 // pred_check_branch
      %58 = sbr.rel (0) target = $region21
    $region20: #{tpu_custom_call.1} parent=1 // pred_region
      %60 = dma.done [#allocation3], 128
    $region21: #{tpu_custom_call.1} parent=1 // pred_fallthru
      _
    // Predicated region
    $region22: #{tpu_custom_call.1} parent=1 // pred_check
      _
    $region23: #{tpu_custom_call.1} parent=1 // pred_check_branch
      %62 = sbr.rel (0) target = $region25
    $region24: #{tpu_custom_call.1} parent=1 // pred_region
      %64 = dma.done [#allocation6], 256
    $region25: #{tpu_custom_call.1} parent=1 // pred_fallthru
      _
    // Predicated region
    $region26: #{tpu_custom_call.1} parent=1 // pred_check
      _
    $region27: #{tpu_custom_call.1} parent=1 // pred_check_branch
      %66 = sbr.rel (0) target = $region29
    $region28: #{tpu_custom_call.1} parent=1 // pred_region
      %68 = dma.done [#allocation6], 256
    $region29: #{tpu_custom_call.1} parent=1 // pred_fallthru
      _
    // Predicated region
    $region30: #{tpu_custom_call.1} parent=1 // pred_check
      _
    $region31: #{tpu_custom_call.1} parent=1 // pred_check_branch
      %70 = sbr.rel (0) target = $region33
    $region32: #{tpu_custom_call.1} parent=1 // pred_region
      %72 = dma.done [#allocation9], 256
    $region33: #{tpu_custom_call.1} parent=1 // pred_fallthru
      _
    %v73 = vld [vmem:[#allocation2] sm:$0xff]
    %v74 = vld [vmem:[#allocation5] sm:$0xff]
    %v75 = vld [vmem:[#allocation5 + $0x8] sm:$0xff]
    %v76 = vld [vmem:[#allocation7] sm:$0xff]
    %v77 = vld [vmem:[#allocation7 + $0x8] sm:$0xff]
    %v78 = vld [vmem:[#allocation8] sm:$0xff]
    %v79 = vld [vmem:[#allocation8 + $0x8] sm:$0xff]
    %81 = vset.pattern.permute.xlu0 0
    %82 = vperm.xlu0 %81, %v73
    %v83 = vpop.permute.xlu0 %82
    %v85 = vperm.slane %v74, 0
    %v86 = vperm.slane %v75, 0
    %v87 = vmul.f32 %v83, %v85
    %v88 = vmul.f32 %v83, %v86
    %89 = vset.pattern.permute.xlu0 24
    %90 = vperm.xlu0 %89, %v73
    %v91 = vpop.permute.xlu0 %90
    %v93 = vadd.f32 %v91, %v87
    %v94 = vadd.f32 %v91, %v88
    %95 = vset.pattern.permute.xlu0 1
    %96 = vperm.xlu0 %95, %v73
    %v97 = vpop.permute.xlu0 %96
    %v99 = vperm.slane %v74, 1
    %v100 = vperm.slane %v75, 1
    %v101 = vmul.f32 %v97, %v99
    %v102 = vmul.f32 %v97, %v100
    %v103 = vadd.f32 %v93, %v101
    %v104 = vadd.f32 %v94, %v102
    %105 = vset.pattern.permute.xlu0 2
    %106 = vperm.xlu0 %105, %v73
    %v107 = vpop.permute.xlu0 %106
    %v109 = vperm.slane %v74, 2
    %v110 = vperm.slane %v75, 2
    %v111 = vmul.f32 %v107, %v109
    %v112 = vmul.f32 %v107, %v110
    %v113 = vadd.f32 %v103, %v111
    %v114 = vadd.f32 %v104, %v112
    %115 = vset.pattern.permute.xlu0 3
    %116 = vperm.xlu0 %115, %v73
    %v117 = vpop.permute.xlu0 %116
    %v119 = vperm.slane %v74, 3
    %v120 = vperm.slane %v75, 3
    %v121 = vmul.f32 %v117, %v119
    %v122 = vmul.f32 %v117, %v120
    %v123 = vadd.f32 %v113, %v121
    %v124 = vadd.f32 %v114, %v122
    %125 = vset.pattern.permute.xlu0 4
    %126 = vperm.xlu0 %125, %v73
    %v127 = vpop.permute.xlu0 %126
    %v129 = vperm.slane %v74, 4
    %v130 = vperm.slane %v75, 4
    %v131 = vmul.f32 %v127, %v129
    %v132 = vmul.f32 %v127, %v130
    %v133 = vadd.f32 %v123, %v131
    %v134 = vadd.f32 %v124, %v132
    %135 = vset.pattern.permute.xlu0 5
    %136 = vperm.xlu0 %135, %v73
    %v137 = vpop.permute.xlu0 %136
    %v139 = vperm.slane %v74, 5
    %v140 = vperm.slane %v75, 5
    %v141 = vmul.f32 %v137, %v139
    %v142 = vmul.f32 %v137, %v140
    %v143 = vadd.f32 %v133, %v141
    %v144 = vadd.f32 %v134, %v142
    %145 = vset.pattern.permute.xlu0 6
    %146 = vperm.xlu0 %145, %v73
    %v147 = vpop.permute.xlu0 %146
    %v149 = vperm.slane %v74, 6
    %v150 = vperm.slane %v75, 6
    %v151 = vmul.f32 %v147, %v149
    %v152 = vmul.f32 %v147, %v150
    %v153 = vadd.f32 %v143, %v151
    %v154 = vadd.f32 %v144, %v152
    %155 = vset.pattern.permute.xlu0 7
    %156 = vperm.xlu0 %155, %v73
    %v157 = vpop.permute.xlu0 %156
    %v159 = vperm.slane %v74, 7
    %v160 = vperm.slane %v75, 7
    %v161 = vmul.f32 %v157, %v159
    %v162 = vmul.f32 %v157, %v160
    %v163 = vadd.f32 %v153, %v161
    %v164 = vadd.f32 %v154, %v162
    %165 = vset.pattern.permute.xlu0 8
    %166 = vperm.xlu0 %165, %v73
    %v167 = vpop.permute.xlu0 %166
    %v169 = vperm.slane %v76, 0
    %v170 = vperm.slane %v77, 0
    %v171 = vmul.f32 %v167, %v169
    %v172 = vmul.f32 %v167, %v170
    %v173 = vadd.f32 %v163, %v171
    %v174 = vadd.f32 %v164, %v172
    %175 = vset.pattern.permute.xlu0 9
    %176 = vperm.xlu0 %175, %v73
    %v177 = vpop.permute.xlu0 %176
    %v179 = vperm.slane %v76, 1
    %v180 = vperm.slane %v77, 1
    %v181 = vmul.f32 %v177, %v179
    %v182 = vmul.f32 %v177, %v180
    %v183 = vadd.f32 %v173, %v181
    %v184 = vadd.f32 %v174, %v182
    %185 = vset.pattern.permute.xlu0 10
    %186 = vperm.xlu0 %185, %v73
    %v187 = vpop.permute.xlu0 %186
    %v189 = vperm.slane %v76, 2
    %v190 = vperm.slane %v77, 2
    %v191 = vmul.f32 %v187, %v189
    %v192 = vmul.f32 %v187, %v190
    %v193 = vadd.f32 %v183, %v191
    %v194 = vadd.f32 %v184, %v192
    %195 = vset.pattern.permute.xlu0 11
    %196 = vperm.xlu0 %195, %v73
    %v197 = vpop.permute.xlu0 %196
    %v199 = vperm.slane %v76, 3
    %v200 = vperm.slane %v77, 3
    %v201 = vmul.f32 %v197, %v199
    %v202 = vmul.f32 %v197, %v200
    %v203 = vadd.f32 %v193, %v201
    %v204 = vadd.f32 %v194, %v202
    %205 = vset.pattern.permute.xlu0 12
    %206 = vperm.xlu0 %205, %v73
    %v207 = vpop.permute.xlu0 %206
    %v209 = vperm.slane %v76, 4
    %v210 = vperm.slane %v77, 4
    %v211 = vmul.f32 %v207, %v209
    %v212 = vmul.f32 %v207, %v210
    %v213 = vadd.f32 %v203, %v211
    %v214 = vadd.f32 %v204, %v212
    %215 = vset.pattern.permute.xlu0 13
    %216 = vperm.xlu0 %215, %v73
    %v217 = vpop.permute.xlu0 %216
    %v219 = vperm.slane %v76, 5
    %v220 = vperm.slane %v77, 5
    %v221 = vmul.f32 %v217, %v219
    %v222 = vmul.f32 %v217, %v220
    %v223 = vadd.f32 %v213, %v221
    %v224 = vadd.f32 %v214, %v222
    %225 = vset.pattern.permute.xlu0 14
    %226 = vperm.xlu0 %225, %v73
    %v227 = vpop.permute.xlu0 %226
    %v229 = vperm.slane %v76, 6
    %v230 = vperm.slane %v77, 6
    %v231 = vmul.f32 %v227, %v229
    %v232 = vmul.f32 %v227, %v230
    %v233 = vadd.f32 %v223, %v231
    %v234 = vadd.f32 %v224, %v232
    %235 = vset.pattern.permute.xlu0 15
    %236 = vperm.xlu0 %235, %v73
    %v237 = vpop.permute.xlu0 %236
    %v239 = vperm.slane %v76, 7
    %v240 = vperm.slane %v77, 7
    %v241 = vmul.f32 %v237, %v239
    %v242 = vmul.f32 %v237, %v240
    %v243 = vadd.f32 %v233, %v241
    %v244 = vadd.f32 %v234, %v242
    %245 = vset.pattern.permute.xlu0 16
    %246 = vperm.xlu0 %245, %v73
    %v247 = vpop.permute.xlu0 %246
    %v249 = vperm.slane %v78, 0
    %v250 = vperm.slane %v79, 0
    %v251 = vmul.f32 %v247, %v249
    %v252 = vmul.f32 %v247, %v250
    %v253 = vadd.f32 %v243, %v251
    %v254 = vadd.f32 %v244, %v252
    %255 = vset.pattern.permute.xlu0 17
    %256 = vperm.xlu0 %255, %v73
    %v257 = vpop.permute.xlu0 %256
    %v259 = vperm.slane %v78, 1
    %v260 = vperm.slane %v79, 1
    %v261 = vmul.f32 %v257, %v259
    %v262 = vmul.f32 %v257, %v260
    %v263 = vadd.f32 %v253, %v261
    %v264 = vadd.f32 %v254, %v262
    %265 = vset.pattern.permute.xlu0 18
    %266 = vperm.xlu0 %265, %v73
    %v267 = vpop.permute.xlu0 %266
    %v269 = vperm.slane %v78, 2
    %v270 = vperm.slane %v79, 2
    %v271 = vmul.f32 %v267, %v269
    %v272 = vmul.f32 %v267, %v270
    %v273 = vadd.f32 %v263, %v271
    %v274 = vadd.f32 %v264, %v272
    %275 = vset.pattern.permute.xlu0 19
    %276 = vperm.xlu0 %275, %v73
    %v277 = vpop.permute.xlu0 %276
    %v279 = vperm.slane %v78, 3
    %v280 = vperm.slane %v79, 3
    %v281 = vmul.f32 %v277, %v279
    %v282 = vmul.f32 %v277, %v280
    %v283 = vadd.f32 %v273, %v281
    %v284 = vadd.f32 %v274, %v282
    %285 = vset.pattern.permute.xlu0 20
    %286 = vperm.xlu0 %285, %v73
    %v287 = vpop.permute.xlu0 %286
    %v289 = vperm.slane %v78, 4
    %v290 = vperm.slane %v79, 4
    %v291 = vmul.f32 %v287, %v289
    %v292 = vmul.f32 %v287, %v290
    %v293 = vadd.f32 %v283, %v291
    %v294 = vadd.f32 %v284, %v292
    %295 = vset.pattern.permute.xlu0 21
    %296 = vperm.xlu0 %295, %v73
    %v297 = vpop.permute.xlu0 %296
    %v299 = vperm.slane %v78, 5
    %v300 = vperm.slane %v79, 5
    %v301 = vmul.f32 %v297, %v299
    %v302 = vmul.f32 %v297, %v300
    %v303 = vadd.f32 %v293, %v301
    %v304 = vadd.f32 %v294, %v302
    %305 = vset.pattern.permute.xlu0 22
    %306 = vperm.xlu0 %305, %v73
    %v307 = vpop.permute.xlu0 %306
    %v309 = vperm.slane %v78, 6
    %v310 = vperm.slane %v79, 6
    %v311 = vmul.f32 %v307, %v309
    %v312 = vmul.f32 %v307, %v310
    %v313 = vadd.f32 %v303, %v311
    %v314 = vadd.f32 %v304, %v312
    %315 = vset.pattern.permute.xlu0 23
    %316 = vperm.xlu0 %315, %v73
    %v317 = vpop.permute.xlu0 %316
    %v319 = vperm.slane %v78, 7
    %v320 = vperm.slane %v79, 7
    %v321 = vmul.f32 %v317, %v319
    %v322 = vmul.f32 %v317, %v320
    %v323 = vadd.f32 %v313, %v321
    %v324 = vadd.f32 %v314, %v322
    %325 = vst [vmem:[#allocation10] sm:$0xff] %v323
    %326 = vst [vmem:[#allocation10 + $0x8] sm:$0xff] %v324
    // Predicated region
    $region34: #{tpu_custom_call.1} parent=1 // pred_check
      _
    $region35: #{tpu_custom_call.1} parent=1 // pred_check_branch
      %328 = sbr.rel (0) target = $region37
    $region36: #{tpu_custom_call.1} parent=1 // pred_region
      %330 = vsyncadd [#allocation4], 0
      %s332 = sshll.u32 [#allocation10], 4
      %s333 = int_to_ptr.vmem [resolvable:$true] %s332
      %s334 = sshll.u32 %s4, 4
      %s335 = int_to_ptr.hbm [resolvable:$true] %s334
      %337 = dma.vmem_to_hbm [thread:$0]  %s333, 256, %s335, [#allocation4]
    $region37: #{tpu_custom_call.1} parent=1 // pred_fallthru
      _
    // Predicated region
    $region38: #{tpu_custom_call.1} parent=1 // pred_check
      _
    $region39: #{tpu_custom_call.1} parent=1 // pred_check_branch
      %339 = sbr.rel (0) target = $region41
    $region40: #{tpu_custom_call.1} parent=1 // pred_region
      %341 = dma.done [#allocation4], 256
    $region41: #{tpu_custom_call.1} parent=1 // pred_fallthru
      _
    %342 = vsyncpa [#allocation3], 1
    %343 = vsyncpa [#allocation6], 1
    %344 = vsyncpa [#allocation9], 1
    %345 = vsyncpa [#allocation4], 1

</llo_original>
